<compile_context>
chip_gen: v6e
topology: v6e:2x2x1
jax: 0.10.0
libtpu: 0.0.40
codegen_flags: <defaults>
</compile_context>

<pallas_src>
import functools

import jax
import jax.numpy as jnp
from jax.experimental import pallas as pl
from jax.experimental.pallas import tpu as pltpu


def _silu(x):
    return x * jax.nn.sigmoid(x)


# ---------------------------------------------------------------------------
# Kernel 1: stem conv (im2col matmul + folded-BN bias + SiLU) fused with
#           global average pool.  Layout: (C, K) @ (K, HW_tile) -> (C, HW_tile).
# ---------------------------------------------------------------------------
def stem_pool_kernel(patches_ref, w_ref, b_ref, out_ref, *, hw, tile_cols, needs_mask):
    t = pl.program_id(1)
    nt = pl.num_programs(1)

    @pl.when(t == 0)
    def _init():
        out_ref[...] = jnp.zeros_like(out_ref)

    # (C=32, K=27) @ (K=27, TH) -> (C, TH); bf16 operands, f32 accumulate on MXU.
    y = jnp.dot(w_ref[...], patches_ref[0], preferred_element_type=jnp.float32)
    y = _silu(y + b_ref[...])                       # f32 SiLU (v5e: no bf16 VPU/EUP)

    if needs_mask:
        # Interior tiles never contain padded columns -> no mask work there.
        @pl.when(t < nt - 1)
        def _interior():
            out_ref[...] += jnp.sum(y, axis=-1, keepdims=True)[None]

        @pl.when(t == nt - 1)
        def _boundary():
            col = t * tile_cols + jax.lax.broadcasted_iota(jnp.int32, y.shape, 1)
            ym = jnp.where(col < hw, y, 0.0)        # select: OOB garbage cannot leak
            out_ref[...] += jnp.sum(ym, axis=-1, keepdims=True)[None]
            out_ref[...] = out_ref[...] * (1.0 / hw)
    else:
        out_ref[...] += jnp.sum(y, axis=-1, keepdims=True)[None]

        @pl.when(t == nt - 1)
        def _finalize():
            out_ref[...] = out_ref[...] * (1.0 / hw)


def stem_conv_pool(patches, w, b):
    """patches: (B, K, HW) bf16, w: (C, K) bf16, b: (C, 1) f32 -> pooled (B, C) f32."""
    B, K, HW = patches.shape
    C = w.shape[0]

    MAX_TILE = 2048                    # ~110 KB bf16 per tile; fits all generations
    TH = HW if HW <= MAX_TILE else MAX_TILE
    num_tiles = pl.cdiv(HW, TH)
    needs_mask = (HW % TH) != 0        # no jnp.pad of patches — mask the last tile

    kernel = functools.partial(stem_pool_kernel, hw=HW, tile_cols=TH,
                               needs_mask=needs_mask)
    out = pl.pallas_call(
        kernel,
        out_shape=jax.ShapeDtypeStruct((B, C, 1), jnp.float32),
        grid=(B, num_tiles),
        in_specs=[
            pl.BlockSpec((1, K, TH), lambda b_, t: (b_, 0, t)),
            pl.BlockSpec((C, K), lambda b_, t: (0, 0)),
            pl.BlockSpec((C, 1), lambda b_, t: (0, 0)),
        ],
        out_specs=pl.BlockSpec((1, C, 1), lambda b_, t: (b_, 0, 0)),
        compiler_params=pltpu.CompilerParams(
            dimension_semantics=("parallel", "arbitrary"),
            vmem_limit_bytes=32 << 20,
        ),
    )(patches, w, b)
    return out.reshape(B, C)


# ---------------------------------------------------------------------------
# Kernel 2: fused head, tiled over B with resident bf16 weights.
#   Linear(32->1280)+SiLU (MBConv-stack proxy) -> Linear(1280->512) = embedding
#   -> single Linear(512 -> num_class+1) = concat(classifier, extraNode)
# ---------------------------------------------------------------------------
def head_kernel(pooled_ref, wf_ref, bf_ref, we_ref, be_ref, wo_ref, bo_ref,
                emb_ref, res_ref):
    p = pooled_ref[...].astype(jnp.bfloat16)
    h = _silu(jnp.dot(p, wf_ref[...], preferred_element_type=jnp.float32)
              + bf_ref[...])                                               # (TB, 1280)
    # backbone.classifier[1]: Linear(1280 -> 512) => returned embedding x
    emb = jnp.dot(h.astype(jnp.bfloat16), we_ref[...],
                  preferred_element_type=jnp.float32) + be_ref[...]        # (TB, 512)
    emb_ref[...] = emb.astype(emb_ref.dtype)
    # [classifier | extraNode] fused: one matmul, one lane-contiguous store.
    res_ref[...] = (jnp.dot(emb.astype(jnp.bfloat16), wo_ref[...],
                            preferred_element_type=jnp.float32)
                    + bo_ref[...]).astype(res_ref.dtype)                   # (TB, NC+1)


def head(pooled, wf, bf, we, be, wo, bo):
    B, C = pooled.shape
    F1 = wf.shape[1]
    E = we.shape[1]
    O = wo.shape[1]
    TB = B if B <= 256 else 256
    nb = pl.cdiv(B, TB)
    # TODO(synk): if num_class grows large, pad O up to a multiple of 128 in the
    #             fused weight and slice outside the kernel (lane-dense stores).
    return pl.pallas_call(
        head_kernel,
        out_shape=(
            jax.ShapeDtypeStruct((B, E), jnp.float32),
            jax.ShapeDtypeStruct((B, O), jnp.float32),
        ),
        grid=(nb,),
        in_specs=[
            pl.BlockSpec((TB, C), lambda i: (i, 0)),
            pl.BlockSpec((C, F1), lambda i: (0, 0)),   # weights: constant index_map,
            pl.BlockSpec((1, F1), lambda i: (0, 0)),   # stay resident across B tiles
            pl.BlockSpec((F1, E), lambda i: (0, 0)),
            pl.BlockSpec((1, E), lambda i: (0, 0)),
            pl.BlockSpec((E, O), lambda i: (0, 0)),
            pl.BlockSpec((1, O), lambda i: (0, 0)),
        ],
        out_specs=(
            pl.BlockSpec((TB, E), lambda i: (i, 0)),
            pl.BlockSpec((TB, O), lambda i: (i, 0)),
        ),
        compiler_params=pltpu.CompilerParams(
            dimension_semantics=("parallel",),
            vmem_limit_bytes=32 << 20,
        ),
    )(pooled, wf, bf, we, be, wo, bo)


# ---------------------------------------------------------------------------
# Glue: im2col (K-major layout), parameters, full forward wrapper
# ---------------------------------------------------------------------------
def im2col_khw(x_nhwc, ksize=3, stride=2, pad=1):
    """Returns patches laid out (B, K=kh*kw*Cin, Ho*Wo) so HW sits on lanes."""
    B, H, W, C = x_nhwc.shape
    xp = jnp.pad(x_nhwc, ((0, 0), (pad, pad), (pad, pad), (0, 0)))
    Ho = (H + 2 * pad - ksize) // stride + 1
    Wo = (W + 2 * pad - ksize) // stride + 1
    cols = []
    for i in range(ksize):
        for j in range(ksize):
            cols.append(xp[:, i:i + stride * Ho:stride,
                           j:j + stride * Wo:stride, :])      # (B, Ho, Wo, C)
    p = jnp.stack(cols, axis=1)                               # (B, kh*kw, Ho, Wo, C)
    p = jnp.transpose(p, (0, 1, 4, 2, 3))                     # (B, kh*kw, C, Ho, Wo)
    return p.reshape(B, ksize * ksize * C, Ho * Wo), Ho, Wo


def make_params(key, num_class):
    """PyTorch-layout parameters (conv: (Cout,Cin,kh,kw), Linear: (out,in))."""
    ks = jax.random.split(key, 6)
    Cin, Cs, F1, E = 3, 32, 1280, 512
    p = {}
    p["w_stem"] = 0.1 * jax.random.normal(ks[0], (Cs, Cin, 3, 3), jnp.float32)
    p["b_stem"] = jnp.zeros((Cs,), jnp.float32)               # folded BN bias
    p["w_feat"] = 0.05 * jax.random.normal(ks[1], (F1, Cs), jnp.float32)
    p["b_feat"] = jnp.zeros((F1,), jnp.float32)
    p["w_emb"] = 0.02 * jax.random.normal(ks[2], (E, F1), jnp.float32)
    p["b_emb"] = jnp.zeros((E,), jnp.float32)
    p["w_cls"] = 0.02 * jax.random.normal(ks[3], (num_class, E), jnp.float32)
    p["b_cls"] = jnp.zeros((num_class,), jnp.float32)
    p["w_extra"] = 0.02 * jax.random.normal(ks[4], (1, E), jnp.float32)
    p["b_extra"] = jnp.zeros((1,), jnp.float32)
    return p


def prepare_params(p):
    """Hoisted once: bf16 casts, kernel layouts, [classifier | extraNode] fusion."""
    Cs = p["w_stem"].shape[0]
    # conv (Cout,Cin,kh,kw) -> (Cout, kh*kw*Cin) to match im2col (kh, kw, Cin) order.
    w_stem = jnp.transpose(p["w_stem"], (0, 2, 3, 1)).reshape(Cs, -1)
    kp = {
        "w_stem": w_stem.astype(jnp.bfloat16),                     # (32, 27)
        "b_stem": p["b_stem"].reshape(-1, 1).astype(jnp.float32),  # (32, 1)
        "w_feat": p["w_feat"].T.astype(jnp.bfloat16),              # (32, 1280)
        "b_feat": p["b_feat"].reshape(1, -1).astype(jnp.float32),
        "w_emb": p["w_emb"].T.astype(jnp.bfloat16),                # (1280, 512)
        "b_emb": p["b_emb"].reshape(1, -1).astype(jnp.float32),
    }
    w_out = jnp.concatenate([p["w_cls"].T, p["w_extra"].T], axis=1)   # (512, NC+1)
    b_out = jnp.concatenate([p["b_cls"], p["b_extra"]]).reshape(1, -1)
    kp["w_out"] = w_out.astype(jnp.bfloat16)
    kp["b_out"] = b_out.astype(jnp.float32)
    return kp


def efficientnet_extranode_forward(kparams, x_nchw, label):
    # `label` is an argument of the PyTorch forward but is unused there.
    del label
    x_nhwc = jnp.transpose(x_nchw, (0, 2, 3, 1)).astype(jnp.bfloat16)   # NCHW -> NHWC
    patches, _, _ = im2col_khw(x_nhwc)                                   # (B, 27, HW) bf16

    pooled = stem_conv_pool(patches, kparams["w_stem"], kparams["b_stem"])   # (B, 32)

    emb, result = head(pooled,
                       kparams["w_feat"], kparams["b_feat"],
                       kparams["w_emb"], kparams["b_emb"],
                       kparams["w_out"], kparams["b_out"])
    return emb, result                                                    # (x, result)


if __name__ == "__main__":
    num_class = 10
    key = jax.random.PRNGKey(0)
    k_x, k_p = jax.random.split(key)

    # small synthetic input consistent with the module's image input (NCHW)
    x = jax.random.normal(k_x, (2, 3, 16, 16), jnp.float32)
    label = jnp.zeros((2,), jnp.int32)   # present in forward signature, unused
    params = make_params(k_p, num_class)
    kparams = prepare_params(params)     # hoisted: done once, not per forward call

    emb, result = efficientnet_extranode_forward(kparams, x, label)
    jax.block_until_ready((emb, result))

    assert emb.shape == (2, 512)
    assert result.shape == (2, num_class + 1)
    assert bool(jnp.all(jnp.isfinite(emb))) and bool(jnp.all(jnp.isfinite(result)))
    print("KERNEL_OK")
</pallas_src>

<mosaic_0001>
module attributes {stable_mosaic.version = 11 : i64} {
  func.func @stem_pool_kernel(%arg0: i32, %arg1: i32, %arg2: memref<1x27x64xbf16, #tpu.memory_space<vmem>>, %arg3: memref<32x27xbf16, #tpu.memory_space<vmem>>, %arg4: memref<32x1xf32, #tpu.memory_space<vmem>>, %arg5: memref<1x32x1xf32, #tpu.memory_space<vmem>>) attributes {dimension_semantics = [#tpu.dimension_semantics<parallel>, #tpu.dimension_semantics<arbitrary>], iteration_bounds = array<i64: 2, 1>, scalar_prefetch = 0 : i64, scratch_operands = 0 : i64, tpu.core_type = #tpu.core_type<tc>, window_params = [{transform_indices = @transform_0, window_bounds = array<i64: 1, 27, 64>}, {pipeline_mode = #tpu.pipeline_mode<synchronous>, transform_indices = @transform_1, window_bounds = array<i64: 32, 27>}, {pipeline_mode = #tpu.pipeline_mode<synchronous>, transform_indices = @transform_2, window_bounds = array<i64: 32, 1>}, {transform_indices = @transform_3, window_bounds = array<i64: 1, 32, 1>}]} {
    %c0_i32 = arith.constant 0 : i32
    %0 = arith.cmpi eq, %arg1, %c0_i32 : i32
    %1 = arith.extui %0 : i1 to i32
    %c0_i32_0 = arith.constant 0 : i32
    %2 = arith.cmpi ne, %1, %c0_i32_0 : i32
    scf.if %2 {
      %cst_17 = arith.constant 0.000000e+00 : f32
      %25 = vector.broadcast %cst_17 : f32 to vector<1x32x1xf32>
      %c0_18 = arith.constant 0 : index
      %c0_19 = arith.constant 0 : index
      %c0_20 = arith.constant 0 : index
      %26 = vector.load %arg5[%c0_18, %c0_19, %c0_20] : memref<1x32x1xf32, #tpu.memory_space<vmem>>, vector<1x32x1xf32>
      tpu.vector_store %arg5[%c0_18, %c0_19, %c0_20], %25 {strides = array<i32>} : memref<1x32x1xf32, #tpu.memory_space<vmem>>, vector<1x32x1xf32>,
    } else {
    }
    %c0 = arith.constant 0 : index
    %c0_1 = arith.constant 0 : index
    %3 = vector.load %arg3[%c0, %c0_1] : memref<32x27xbf16, #tpu.memory_space<vmem>>, vector<32x27xbf16>
    %c0_2 = arith.constant 0 : index
    %c0_3 = arith.constant 0 : index
    %c0_4 = arith.constant 0 : index
    %4 = vector.load %arg2[%c0_2, %c0_3, %c0_4] : memref<1x27x64xbf16, #tpu.memory_space<vmem>>, vector<1x27x64xbf16>
    %5 = vector.shape_cast %4 : vector<1x27x64xbf16> to vector<27x64xbf16>
    %cst = arith.constant dense<0.000000e+00> : vector<32x64xf32>
    %6 = tpu.matmul %3, %5, %cst {dimension_numbers = #tpu.dot_dimension_numbers<[1], [0], [0], [1], [0, 0, 1, 1], [], []>} : vector<32x27xbf16>, vector<27x64xbf16>, vector<32x64xf32> -> vector<32x64xf32>
    %c0_5 = arith.constant 0 : index
    %c0_6 = arith.constant 0 : index
    %7 = vector.load %arg4[%c0_5, %c0_6] : memref<32x1xf32, #tpu.memory_space<vmem>>, vector<32x1xf32>
    %8 = vector.broadcast %7 : vector<32x1xf32> to vector<32x64xf32>
    %9 = arith.addf %6, %8 : vector<32x64xf32>
    %10 = arith.negf %9 : vector<32x64xf32>
    %11 = math.exp %10 : vector<32x64xf32>
    %cst_7 = arith.constant 1.000000e+00 : f32
    %12 = vector.broadcast %cst_7 : f32 to vector<32x64xf32>
    %13 = arith.addf %12, %11 : vector<32x64xf32>
    %14 = arith.divf %12, %13 : vector<32x64xf32>
    %15 = arith.mulf %9, %14 : vector<32x64xf32>
    %c0_8 = arith.constant 0 : index
    %c0_9 = arith.constant 0 : index
    %c0_10 = arith.constant 0 : index
    %16 = vector.load %arg5[%c0_8, %c0_9, %c0_10] : memref<1x32x1xf32, #tpu.memory_space<vmem>>, vector<1x32x1xf32>
    %cst_11 = arith.constant dense<0.000000e+00> : vector<32xf32>
    %17 = vector.multi_reduction <add>, %15, %cst_11 [1] : vector<32x64xf32> to vector<32xf32>
    %18 = vector.shape_cast %17 : vector<32xf32> to vector<32x1xf32>
    %19 = vector.shape_cast %18 : vector<32x1xf32> to vector<1x32x1xf32>
    %20 = arith.addf %16, %19 : vector<1x32x1xf32>
    %c0_12 = arith.constant 0 : index
    %c0_13 = arith.constant 0 : index
    %c0_14 = arith.constant 0 : index
    %21 = vector.load %arg5[%c0_12, %c0_13, %c0_14] : memref<1x32x1xf32, #tpu.memory_space<vmem>>, vector<1x32x1xf32>
    tpu.vector_store %arg5[%c0_12, %c0_13, %c0_14], %20 {strides = array<i32>} : memref<1x32x1xf32, #tpu.memory_space<vmem>>, vector<1x32x1xf32>,
    %c0_i32_15 = arith.constant 0 : i32
    %22 = arith.cmpi eq, %arg1, %c0_i32_15 : i32
    %23 = arith.extui %22 : i1 to i32
    %c0_i32_16 = arith.constant 0 : i32
    %24 = arith.cmpi ne, %23, %c0_i32_16 : i32
    scf.if %24 {
      %c0_17 = arith.constant 0 : index
      %c0_18 = arith.constant 0 : index
      %c0_19 = arith.constant 0 : index
      %25 = vector.load %arg5[%c0_17, %c0_18, %c0_19] : memref<1x32x1xf32, #tpu.memory_space<vmem>>, vector<1x32x1xf32>
      %cst_20 = arith.constant 1.562500e-02 : f32
      %26 = vector.broadcast %cst_20 : f32 to vector<1x32x1xf32>
      %27 = arith.mulf %25, %26 : vector<1x32x1xf32>
      %c0_21 = arith.constant 0 : index
      %c0_22 = arith.constant 0 : index
      %c0_23 = arith.constant 0 : index
      %28 = vector.load %arg5[%c0_21, %c0_22, %c0_23] : memref<1x32x1xf32, #tpu.memory_space<vmem>>, vector<1x32x1xf32>
      tpu.vector_store %arg5[%c0_21, %c0_22, %c0_23], %27 {strides = array<i32>} : memref<1x32x1xf32, #tpu.memory_space<vmem>>, vector<1x32x1xf32>,
    } else {
    }
    return
  }
  func.func @transform_0(%arg0: i32, %arg1: i32) -> (i32, i32, i32) {
    %c0_i32 = arith.constant 0 : i32
    %c0_i32_0 = arith.constant 0 : i32
    return %arg0, %c0_i32, %arg1 : i32, i32, i32
  }
  func.func @transform_1(%arg0: i32, %arg1: i32) -> (i32, i32) {
    %c0_i32 = arith.constant 0 : i32
    %c0_i32_0 = arith.constant 0 : i32
    %c0_i32_1 = arith.constant 0 : i32
    return %c0_i32, %c0_i32_0 : i32, i32
  }
  func.func @transform_2(%arg0: i32, %arg1: i32) -> (i32, i32) {
    %c0_i32 = arith.constant 0 : i32
    %c0_i32_0 = arith.constant 0 : i32
    %c0_i32_1 = arith.constant 0 : i32
    return %c0_i32, %c0_i32_0 : i32, i32
  }
  func.func @transform_3(%arg0: i32, %arg1: i32) -> (i32, i32, i32) {
    %c0_i32 = arith.constant 0 : i32
    %c0_i32_0 = arith.constant 0 : i32
    %c0_i32_1 = arith.constant 0 : i32
    return %arg0, %c0_i32, %c0_i32_0 : i32, i32, i32
  }
}

</mosaic_0001>

<llo_original>
// kernel: tpu_custom_call.1
$region0: #{tpu_custom_call.1}
  #allocation0 [shape = 'u32[]', space=smem, size = 0x4, offset = 0x4, fixed_abs, tag = 'smem constant byte address 0x4 - core index']
  #allocation1 [shape = 'u32[144,128]{1,0:T(1,128)}', space=vmem, size = 0x12000, scoped, tag = 'internal scratch']
  %s0 = inlined_call_operand.vmem [shape: bf16[2,27,64], index: 0, kind: input, shape index: {}]
  %s1 = inlined_call_operand.vmem [shape: bf16[32,27], index: 1, kind: input, shape index: {}]
  %s2 = inlined_call_operand.vmem [shape: f32[32,1], index: 2, kind: input, shape index: {}]
  %s3 = inlined_call_operand.vmem [shape: f32[2,32,1], index: 3, kind: output, shape index: {}]
  %s4 = sld [smem:[#allocation0]]
  $region53: #{tpu_custom_call.1} parent=0
    _
  %s6 = ssub.s32 1, %s4
  %s7 = scalar_select 0, %s6, %s4
  loop: start=0, step=1, limit=4
  $region2: #{tpu_custom_call.1} parent=0 // loop_pre_header
    _
  $region3: #{tpu_custom_call.1} parent=0 // loop_header
    %s9 = sphi 0, %s13
    %p10 = scmp.ge.s32.totalorder %s9, 4
    %s16 = sphi 0, %s28
    %s17 = sphi 0, %s24
    %s18 = sphi 0, %s16
    %s19 = sphi 0, %s17
    %s20 = sphi 0, %s18
    %s21 = sphi 0, %s19
    %s33 = sphi 0, %s35
    %s36 = sphi 0, %s33
    %s37 = sphi 0, %s36
    %s53 = sphi 0, %s37
    %s57 = sphi 0, %s57
    %s59 = sphi 0, %s57
    %s60 = sphi 0, %s59
    %s74 = sphi 0, %s60
    %s78 = sphi 0, %s78
    %s80 = sphi 0, %s78
    %s81 = sphi 0, %s80
    %s95 = sphi 0, %s81
    %s101 = sphi 0, %s103
    %s104 = sphi 0, %s101
    %s105 = sphi 0, %s104
    %s121 = sphi 0, %s105
  $region4: #{tpu_custom_call.1} parent=0 // loop_header_branch
    %12 = sbr.rel (%p10) target = $region8
  $region5: #{tpu_custom_call.1} parent=0 // loop_body
    %s14 = ssub.s32 %s9, 1
    %s15 = ssub.s32 %s9, 2
    %s22 = sadd.s32 1, %s17
    %p23 = scmp.ge.s32.totalorder %s22, 1
    %s24 = scalar_select %p23, 0, %s22
    %s25 = sadd.s32 1, %s16
    %s26 = scalar_select %p23, %s25, %s16
    %p27 = scmp.ge.s32.totalorder %s26, 2
    %s28 = scalar_select %p27, 0, %s26
    %s29 = ssub.s32 %s16, %s28
    %s30 = ssub.s32 %s17, %s24
    %s31 = sor.u32 %s29, %s30
    %p32 = scmp.eq.s32.totalorder %s31, 0
    %s34 = sadd.s32 %s33, 1
    %s35 = scalar_select %p32, %s33, %s34
    %p38 = pneg %p32
    %p39 = scmp.eq.s32.totalorder %s9, 1
    %p40 = por %p38, %p39
    %p41 = scmp.ne.s32.totalorder %s33, %s36
    %p42 = scmp.eq.s32.totalorder %s9, 0
    %p43 = por %p41, %p42
    %p44 = scmp.ne.s32.totalorder %s33, %s36
    %p45 = scmp.eq.s32.totalorder %s14, 1
    %p46 = por %p44, %p45
    %p47 = scmp.ne.s32.totalorder %s36, %s37
    %p48 = scmp.eq.s32.totalorder %s14, 0
    %p49 = por %p47, %p48
    %p50 = scmp.ne.s32.totalorder %s36, %s37
    %p51 = scmp.eq.s32.totalorder %s15, 1
    %p52 = por %p50, %p51
    %p54 = scmp.ne.s32.totalorder %s37, %s53
    %p55 = scmp.eq.s32.totalorder %s15, 0
    %p56 = por %p54, %p55
    %s58 = sadd.s32 %s57, 1
    %p61 = scmp.eq.s32.totalorder %s9, 1
    %p62 = scmp.ne.s32.totalorder %s57, %s59
    %p63 = scmp.eq.s32.totalorder %s9, 0
    %p64 = por %p62, %p63
    %p65 = scmp.ne.s32.totalorder %s57, %s59
    %p66 = scmp.eq.s32.totalorder %s14, 1
    %p67 = por %p65, %p66
    %p68 = scmp.ne.s32.totalorder %s59, %s60
    %p69 = scmp.eq.s32.totalorder %s14, 0
    %p70 = por %p68, %p69
    %p71 = scmp.ne.s32.totalorder %s59, %s60
    %p72 = scmp.eq.s32.totalorder %s15, 1
    %p73 = por %p71, %p72
    %p75 = scmp.ne.s32.totalorder %s60, %s74
    %p76 = scmp.eq.s32.totalorder %s15, 0
    %p77 = por %p75, %p76
    %s79 = sadd.s32 %s78, 1
    %p82 = scmp.eq.s32.totalorder %s9, 1
    %p83 = scmp.ne.s32.totalorder %s78, %s80
    %p84 = scmp.eq.s32.totalorder %s9, 0
    %p85 = por %p83, %p84
    %p86 = scmp.ne.s32.totalorder %s78, %s80
    %p87 = scmp.eq.s32.totalorder %s14, 1
    %p88 = por %p86, %p87
    %p89 = scmp.ne.s32.totalorder %s80, %s81
    %p90 = scmp.eq.s32.totalorder %s14, 0
    %p91 = por %p89, %p90
    %p92 = scmp.ne.s32.totalorder %s80, %s81
    %p93 = scmp.eq.s32.totalorder %s15, 1
    %p94 = por %p92, %p93
    %p96 = scmp.ne.s32.totalorder %s81, %s95
    %p97 = scmp.eq.s32.totalorder %s15, 0
    %p98 = por %p96, %p97
    %s99 = ssub.s32 %s16, %s28
    %p100 = scmp.eq.s32.totalorder %s99, 0
    %s102 = sadd.s32 %s101, 1
    %s103 = scalar_select %p100, %s101, %s102
    %p106 = pneg %p100
    %p107 = scmp.eq.s32.totalorder %s9, 1
    %p108 = por %p106, %p107
    %p109 = scmp.ne.s32.totalorder %s101, %s104
    %p110 = scmp.eq.s32.totalorder %s9, 0
    %p111 = por %p109, %p110
    %p112 = scmp.ne.s32.totalorder %s101, %s104
    %p113 = scmp.eq.s32.totalorder %s14, 1
    %p114 = por %p112, %p113
    %p115 = scmp.ne.s32.totalorder %s104, %s105
    %p116 = scmp.eq.s32.totalorder %s14, 0
    %p117 = por %p115, %p116
    %p118 = scmp.ne.s32.totalorder %s104, %s105
    %p119 = scmp.eq.s32.totalorder %s15, 1
    %p120 = por %p118, %p119
    %p122 = scmp.ne.s32.totalorder %s105, %s121
    %p123 = scmp.eq.s32.totalorder %s15, 0
    %p124 = por %p122, %p123
    %p125 = scmp.le.s32.totalorder 1, %s9
    %p126 = scmp.lt.s32.totalorder %s9, 3
    %p127 = pnand %p125, %p126
    %p128 = pneg %p127
    // Predicated region
    $region9: #{tpu_custom_call.1} parent=5 // pred_check
      _
    $region10: #{tpu_custom_call.1} parent=5 // pred_check_branch
      %130 = sbr.rel (%p127) target = $region12
    $region11: #{tpu_custom_call.1} parent=5 // pred_region
      %s131 = ssub.s32 %s9, 1
      // Predicated region
      $region13: #{tpu_custom_call.1} parent=11 // pred_check
        %p132 = pneg %p70
      $region14: #{tpu_custom_call.1} parent=11 // pred_check_branch
        %134 = sbr.rel (%p132) target = $region16
      $region15: #{tpu_custom_call.1} parent=11 // pred_region
        _
      $region16: #{tpu_custom_call.1} parent=11 // pred_fallthru
        _
      // Predicated region
      $region17: #{tpu_custom_call.1} parent=11 // pred_check
        %p135 = pneg %p91
      $region18: #{tpu_custom_call.1} parent=11 // pred_check_branch
        %137 = sbr.rel (%p135) target = $region20
      $region19: #{tpu_custom_call.1} parent=11 // pred_region
        _
      $region20: #{tpu_custom_call.1} parent=11 // pred_fallthru
        _
    $region12: #{tpu_custom_call.1} parent=5 // pred_fallthru
      _
    %p138 = scmp.lt.s32.totalorder %s9, 2
    // Predicated region
    $region21: #{tpu_custom_call.1} parent=5 // pred_check
      %p139 = pneg %p138
    $region22: #{tpu_custom_call.1} parent=5 // pred_check_branch
      %141 = sbr.rel (%p139) target = $region24
    $region23: #{tpu_custom_call.1} parent=5 // pred_region
      // Predicated region
      $region25: #{tpu_custom_call.1} parent=23 // pred_check
        %p142 = pneg %p43
      $region26: #{tpu_custom_call.1} parent=23 // pred_check_branch
        %144 = sbr.rel (%p142) target = $region28
      $region27: #{tpu_custom_call.1} parent=23 // pred_region
        %p145 = scmp.lt.s32.totalorder %s16, 1
        %s146 = scalar_select %p145, %s16, 1
        %p147 = scmp.lt.s32.totalorder %s17, 0
        %s148 = scalar_select %p147, %s17, 0
        %s149 = smul.addr %s146, 4
        %s150 = sadd.s32 %s148, %s149
        %s151 = smul.addr %s150, 4
        %s152 = scalar_lea.vmem %s0, %s151
      $region28: #{tpu_custom_call.1} parent=23 // pred_fallthru
        _
    $region24: #{tpu_custom_call.1} parent=5 // pred_fallthru
      _
    %p153 = scmp.le.s32.totalorder 1, %s9
    %p154 = scmp.lt.s32.totalorder %s9, 3
    %p155 = pnand %p153, %p154
    %p156 = pneg %p155
    // Predicated region
    $region29: #{tpu_custom_call.1} parent=5 // pred_check
      _
    $region30: #{tpu_custom_call.1} parent=5 // pred_check_branch
      %158 = sbr.rel (%p155) target = $region32
    $region31: #{tpu_custom_call.1} parent=5 // pred_region
      %s159 = ssub.s32 %s9, 1
      %p160 = scmp.lt.s32.totalorder %s18, 1
      %s161 = scalar_select %p160, %s18, 1
      %p162 = scmp.lt.s32.totalorder %s19, 0
      %s163 = scalar_select %p162, %s19, 0
      %s164 = smul.addr %s161, 4
      %s165 = sadd.s32 %s163, %s164
      %s166 = smul.addr %s165, 4
      %s167 = scalar_lea.vmem %s0, %s166
      %p168 = pneg %p49
      %p169 = pneg %p46
      %p170 = pneg %p70
      %p171 = pneg %p67
      %p172 = pneg %p91
      %p173 = pneg %p88
      %p174 = pneg %p117
      %p175 = pneg %p114
      %p176 = scmp.lt.s32.totalorder %s18, 1
      %s177 = scalar_select %p176, %s18, 1
      %s178 = smul.addr %s177, 4
      %s179 = smul.addr %s178, 8
      %s180 = scalar_lea.vmem %s3, %s179
      %p181 = scmp.lt.s32.totalorder %s18, 1
      %s182 = scalar_select %p181, %s18, 1
      %p183 = scmp.lt.s32.totalorder %s19, 0
      %s184 = scalar_select %p183, %s19, 0
      %s185 = smul.addr %s182, 4
      %s186 = sadd.s32 %s184, %s185
      %s187 = smul.addr %s186, 4
      %s188 = scalar_lea.vmem %s0, %s187
      %p189 = scmp.lt.s32.totalorder %s18, 1
      %s190 = scalar_select %p189, %s18, 1
      %s191 = smul.addr %s190, 4
      %s192 = smul.addr %s191, 8
      %s193 = scalar_lea.vmem %s3, %s192
      %p195 = scmp.eq.s32.totalorder %s19, 0
      // Predicated region
      $region33: #{tpu_custom_call.1} parent=31 // pred_check
        %p196 = pneg %p195
      $region34: #{tpu_custom_call.1} parent=31 // pred_check_branch
        %198 = sbr.rel (%p196) target = $region36
      $region35: #{tpu_custom_call.1} parent=31 // pred_region
        %vm199 = vcmask 7168
        %200 = vst.msk [vmem:[%s193] sm:$0xff] %vm199, 0.0
        %201 = vst.msk [vmem:[%s193 + $0x8] sm:$0xff] %vm199, 0.0
        %202 = vst.msk [vmem:[%s193 + $0x10] sm:$0xff] %vm199, 0.0
        %203 = vst.msk [vmem:[%s193 + $0x18] sm:$0xff] %vm199, 0.0
      $region36: #{tpu_custom_call.1} parent=31 // pred_fallthru
        _
      %v204 = vld [vmem:[%s1] sm:$0xf]
      %v205 = vld [vmem:[%s1 + $0x4] sm:$0xf]
      %v206 = vld [vmem:[%s1 + $0x8] sm:$0xf]
      %v207 = vld [vmem:[%s1 + $0xc] sm:$0xf]
      %v208 = vld [vmem:[%s188] sm:$0xf]
      %v209 = vld [vmem:[%s188 + $0x4] sm:$0xf]
      %v210 = vld [vmem:[%s188 + $0x8] sm:$0xf]
      %v211 = vld [vmem:[%s188 + $0xc] sm:$0x3]
      %v212 = vld [vmem:[%s2] sm:$0xff]
      %v213 = vld [vmem:[%s2 + $0x8] sm:$0xff]
      %v214 = vld [vmem:[%s2 + $0x10] sm:$0xff]
      %v215 = vld [vmem:[%s2 + $0x18] sm:$0xff]
      %217 = vset.pattern.permute.xlu0 0
      %218 = vperm.xlu0 %217, %v212
      %v219 = vpop.permute.xlu0 %218
      %222 = vset.pattern.permute.xlu0 0
      %223 = vperm.xlu0 %222, %v213
      %v224 = vpop.permute.xlu0 %223
      %227 = vset.pattern.permute.xlu0 0
      %228 = vperm.xlu0 %227, %v214
      %v229 = vpop.permute.xlu0 %228
      %232 = vset.pattern.permute.xlu0 0
      %233 = vperm.xlu0 %232, %v215
      %v234 = vpop.permute.xlu0 %233
      %v240 = vunpack.c.l.b16 %v204
      %v241 = vunpack.c.l.b16 %v205
      %v242 = vunpack.c.l.b16 %v206
      %v243 = vunpack.c.l.b16 %v207
      %v244 = vpack.c.b16 %v241, %v240
      %v245 = vpack.c.b16 %v243, %v242
      %v250 = vunpack.c.l.b16 %v208
      %v251 = vunpack.c.l.b16 %v209
      %v252 = vunpack.c.l.b16 %v210
      %v253 = vunpack.c.l.b16 %v211
      %v254 = vpack.c.b16 %v251, %v250
      %v255 = vpack.c.b16 %v253, %v252
      %vm257 = vcmask 220160
      %v259 = vsel %vm257, %v244, 0
      %v262 = vsel %vm257, %v245, 0
      %vm264 = vcmask 1044480
      %vm265 = vcmask 1045504
      %v266 = vsel %vm264, 4294967295, 65535
      %v267 = vsel %vm265, %v266, 0
      %v269 = vand.u32 %v255, %v267
      %271 = vmatprep.subr.bf16.mxu0 0
      %272 = vmatpush1.bf16.msra.mxu0 0
      %273 = vmatprep.subr.bf16.mxu0 0
      %274 = vmatpush1.bf16.msra.mxu0 0
      %275 = vmatprep.subr.bf16.mxu0 0
      %276 = vmatpush1.bf16.msra.mxu0 0
      %277 = vmatprep.subr.bf16.mxu0 0
      %278 = vmatpush1.bf16.msra.mxu0 0
      %279 = vmatprep.subr.bf16.mxu0 0
      %280 = vmatpush1.bf16.msra.mxu0 0
      %281 = vmatprep.subr.bf16.mxu0 0
      %282 = vmatpush1.bf16.msra.mxu0 0
      %283 = vmatprep.subr.bf16.mxu0 0
      %284 = vmatpush1.bf16.msra.mxu0 %v269
      %285 = vmatprep.subr.bf16.mxu0 0
      %286 = vmatpush1.bf16.msra.mxu0 %v254
      %287 = vmatprep.subr.bf16.mxu0 0
      %288 = vmatpush2.bf16.msra.mxu0 0
      %289 = vmatprep.subr.bf16.mxu0 0
      %290 = vmatpush2.bf16.msra.mxu0 0
      %291 = vmatprep.subr.bf16.mxu0 0
      %292 = vmatpush2.bf16.msra.mxu0 0
      %293 = vmatprep.subr.bf16.mxu0 0
      %294 = vmatpush2.bf16.msra.mxu0 0
      %295 = vmatprep.subr.bf16.mxu0 0
      %296 = vmatpush2.bf16.msra.mxu0 0
      %297 = vmatprep.subr.bf16.mxu0 0
      %298 = vmatpush2.bf16.msra.mxu0 0
      %299 = vmatprep.subr.bf16.mxu0 0
      %300 = vmatpush2.bf16.msra.mxu0 0
      %301 = vmatprep.subr.bf16.mxu0 0
      %302 = vmatpush2.bf16.msra.mxu0 0
      %303 = vmatprep.mubr.bf16.mxu0 0
      %304 = vmatmul.mubr.bf16.gmra.mxu0 %v259
      %v305 = vpop.f32.mrf.mxu0
      %v306 = vadd.f32 %v219, %v305
      %v307 = vpop.f32.mrf.mxu0
      %v308 = vpop.f32.mrf.mxu0
      %v309 = vadd.f32 %v224, %v308
      %v310 = vpop.f32.mrf.mxu0
      %311 = vmatprep.mubr.bf16.mxu0 0
      %312 = vmatmul.mubr.bf16.gmra.mxu0 %v262
      %v313 = vpop.f32.mrf.mxu0
      %v314 = vadd.f32 %v229, %v313
      %v315 = vpop.f32.mrf.mxu0
      %v316 = vpop.f32.mrf.mxu0
      %v317 = vadd.f32 %v234, %v316
      %v318 = vpop.f32.mrf.mxu0
      %319 = vdwg.mxu0
      %v320 = vxor.u32 %v306, 2147483648
      %v321 = vxor.u32 %v309, 2147483648
      %v322 = vxor.u32 %v314, 2147483648
      %v323 = vxor.u32 %v317, 2147483648
      %v324 = vmul.f32 %v320, 1.442695
      %v325 = vpow.pop %v324
      %v326 = vmul.f32 %v321, 1.442695
      %v327 = vpow.pop %v326
      %v328 = vmul.f32 %v322, 1.442695
      %v329 = vpow.pop %v328
      %v330 = vmul.f32 %v323, 1.442695
      %v331 = vpow.pop %v330
      %v332 = vadd.f32 %v325, 1.0
      %v333 = vadd.f32 %v327, 1.0
      %v334 = vadd.f32 %v329, 1.0
      %v335 = vadd.f32 %v331, 1.0
      %v336 = vrcp.pop %v332
      %v337 = vmul.f32 1.0, %v336
      %v338 = vrcp.pop %v333
      %v339 = vmul.f32 1.0, %v338
      %v340 = vrcp.pop %v334
      %v341 = vmul.f32 1.0, %v340
      %v342 = vrcp.pop %v335
      %v343 = vmul.f32 1.0, %v342
      %v344 = vmul.f32 %v306, %v337
      %v345 = vmul.f32 %v309, %v339
      %v346 = vmul.f32 %v314, %v341
      %v347 = vmul.f32 %v317, %v343
      %v348 = vld [vmem:[%s193] sm:$0xff]
      %v349 = vld [vmem:[%s193 + $0x8] sm:$0xff]
      %v350 = vld [vmem:[%s193 + $0x10] sm:$0xff]
      %v351 = vld [vmem:[%s193 + $0x18] sm:$0xff]
      %vm352 = vcmask 523264
      %v353 = vsel %vm352, %v344, 0.0
      %354 = vadd.xlane.f32.xlu0 %v353
      %v355 = vpop.xlane.xlu0 %354
      %v356 = vsel %vm352, %v345, 0.0
      %357 = vadd.xlane.f32.xlu0 %v356
      %v358 = vpop.xlane.xlu0 %357
      %v359 = vsel %vm352, %v346, 0.0
      %360 = vadd.xlane.f32.xlu0 %v359
      %v361 = vpop.xlane.xlu0 %360
      %v362 = vsel %vm352, %v347, 0.0
      %363 = vadd.xlane.f32.xlu0 %v362
      %v364 = vpop.xlane.xlu0 %363
      %v365 = vadd.f32 %v348, %v355
      %v366 = vadd.f32 %v349, %v358
      %v367 = vadd.f32 %v350, %v361
      %v368 = vadd.f32 %v351, %v364
      %vm369 = vcmask 7168
      %370 = vst.msk [vmem:[%s193] sm:$0xff] %vm369, %v365
      %371 = vst.msk [vmem:[%s193 + $0x8] sm:$0xff] %vm369, %v366
      %372 = vst.msk [vmem:[%s193 + $0x10] sm:$0xff] %vm369, %v367
      %373 = vst.msk [vmem:[%s193 + $0x18] sm:$0xff] %vm369, %v368
      // Predicated region
      $region37: #{tpu_custom_call.1} parent=31 // pred_check
        %p374 = pneg %p195
      $region38: #{tpu_custom_call.1} parent=31 // pred_check_branch
        %376 = sbr.rel (%p374) target = $region40
      $region39: #{tpu_custom_call.1} parent=31 // pred_region
        %v377 = vld [vmem:[%s193] sm:$0xff]
        %v378 = vld [vmem:[%s193 + $0x8] sm:$0xff]
        %v379 = vld [vmem:[%s193 + $0x10] sm:$0xff]
        %v380 = vld [vmem:[%s193 + $0x18] sm:$0xff]
        %v381 = vmul.f32 %v377, 0.015625
        %v382 = vmul.f32 %v378, 0.015625
        %v383 = vmul.f32 %v379, 0.015625
        %v384 = vmul.f32 %v380, 0.015625
        %385 = vst.msk [vmem:[%s193] sm:$0xff] %vm369, %v381
        %386 = vst.msk [vmem:[%s193 + $0x8] sm:$0xff] %vm369, %v382
        %387 = vst.msk [vmem:[%s193 + $0x10] sm:$0xff] %vm369, %v383
        %388 = vst.msk [vmem:[%s193 + $0x18] sm:$0xff] %vm369, %v384
      $region40: #{tpu_custom_call.1} parent=31 // pred_fallthru
        _
      %p389 = scmp.lt.s32.totalorder %s18, 1
      %s390 = scalar_select %p389, %s18, 1
      %s391 = smul.addr %s390, 4
      %s392 = smul.addr %s391, 8
      %s393 = scalar_lea.vmem %s3, %s392
      // Predicated region
      $region41: #{tpu_custom_call.1} parent=31 // pred_check
        %p394 = pneg %p114
      $region42: #{tpu_custom_call.1} parent=31 // pred_check_branch
        %396 = sbr.rel (%p394) target = $region44
      $region43: #{tpu_custom_call.1} parent=31 // pred_region
        _
      $region44: #{tpu_custom_call.1} parent=31 // pred_fallthru
        _
    $region32: #{tpu_custom_call.1} parent=5 // pred_fallthru
      _
    %p397 = scmp.le.s32.totalorder 2, %s9
    // Predicated region
    $region45: #{tpu_custom_call.1} parent=5 // pred_check
      %p398 = pneg %p397
    $region46: #{tpu_custom_call.1} parent=5 // pred_check_branch
      %400 = sbr.rel (%p398) target = $region48
    $region47: #{tpu_custom_call.1} parent=5 // pred_region
      %s401 = ssub.s32 %s9, 2
      // Predicated region
      $region49: #{tpu_custom_call.1} parent=47 // pred_check
        %p402 = pneg %p120
      $region50: #{tpu_custom_call.1} parent=47 // pred_check_branch
        %404 = sbr.rel (%p402) target = $region52
      $region51: #{tpu_custom_call.1} parent=47 // pred_region
        %p405 = scmp.lt.s32.totalorder %s20, 1
        %s406 = scalar_select %p405, %s20, 1
        %s407 = smul.addr %s406, 4
        %s408 = smul.addr %s407, 8
        %s409 = scalar_lea.vmem %s3, %s408
      $region52: #{tpu_custom_call.1} parent=47 // pred_fallthru
        _
    $region48: #{tpu_custom_call.1} parent=5 // pred_fallthru
      _
  $region6: #{tpu_custom_call.1} parent=0 // loop_footer
    %s13 = sadd.s32 1, %s9
  $region7: #{tpu_custom_call.1} parent=0 // loop_footer_branch
    %8 = sbr.rel target = $region3
  $region8: #{tpu_custom_call.1} parent=0 // loop_exit
    _

</llo_original>
